<compile_context>
chip_gen: v7x
topology: tpu7x:2x2x1
jax: 0.10.0
libtpu: 0.0.40
codegen_flags: <defaults>
</compile_context>

<pallas_src>
import functools
import math

import jax
import jax.numpy as jnp
from jax import lax
from jax.experimental import pallas as pl
from jax.experimental.pallas import tpu as pltpu


def _round_up(x: int, m: int) -> int:
    return ((x + m - 1) // m) * m


def _pe_kernel(inv_ref, bias_ref, out_ref, *, fold: int):
    """out[r, f] = sin( ((row0 + r) * fold) * inv_denom[f] + bias[f] ).

    inv_ref, bias_ref: (1, D2) column tables (VMEM-resident across steps).
    One multiply + one add + one sin per element; cos via sin(x + pi/2).
    """
    TL = out_ref.shape[0]                      # static block row count
    row0 = pl.program_id(0) * TL               # folded-row offset of this tile
    base = ((lax.broadcasted_iota(jnp.int32, (TL, 1), 0) + row0) * fold).astype(
        jnp.float32
    )
    out_ref[...] = jnp.sin(base * inv_ref[...] + bias_ref[...])


@functools.lru_cache(maxsize=None)
def positional_encoding(d_model: int, max_sequence_length: int) -> jax.Array:
    """PE of shape (max_sequence_length, d_model), float32 — same layout as
    the PyTorch module (position on axis 0, interleaved sin/cos on axis 1)."""
    assert d_model % 2 == 0, "d_model must be even (same as the PyTorch module)"
    L, D = max_sequence_length, d_model

    # ---- lane-dense folding for small d_model -------------------------------
    # If D < 128, compute the output as a row-major-equivalent (L/fold, fold*D)
    # slab so the store last dim is >= 128 (unmasked vst); reshape back after.
    fold = 1
    if D < 128 and 128 % D == 0 and L % (128 // D) == 0:
        fold = 128 // D
    L2, D2 = L // fold, fold * D

    # ---- column tables, hoisted out of the kernel ---------------------------
    flat_col = jnp.arange(D2, dtype=jnp.int32)
    col = flat_col % D                                    # column within d_model
    sub_row = (flat_col // D).astype(jnp.float32)         # row offset inside a fold
    even_i = (col - col % 2).astype(jnp.float32)          # paired even index
    # 1 / denominator = 10000 ** (-even_i / d_model); uses the TRUE d_model.
    inv_denom = jnp.exp(even_i * (-math.log(10000.0) / D))
    # cos(x) = sin(x + pi/2): one transcendental per element.  Note the +pi/2
    # is applied in f32 before range reduction, so odd columns can drift by
    # ~ulp(pos/denom) from exact cos at very large positions; fine for a PE.
    phase = (col % 2).astype(jnp.float32) * (math.pi / 2.0)
    bias = sub_row * inv_denom + phase                    # folds sub-row into the angle
    inv_denom = inv_denom.reshape(1, D2)
    bias = bias.reshape(1, D2)

    # ---- row-tile selection: VMEM-budgeted, >= 4 grid steps when possible ---
    # Real footprint ~= 2 (double buffer) * TL * D2 * 4B + two tiny tables.
    if L2 <= 8:
        TL = L2                                            # block == full array dim
    else:
        budget_bytes = 8 * 1024 * 1024
        tl_vmem = max(8, (budget_bytes // (2 * 4 * D2)) // 8 * 8)
        tl_split = _round_up(pl.cdiv(L2, 4), 8)            # aim for >= 4 row tiles
        TL = max(8, min(512, tl_vmem, tl_split))

    out_tile_bytes = 2 * TL * D2 * 4                       # double-buffered output
    table_bytes = 2 * 2 * D2 * 4                           # two (1, D2) tables x2
    vmem_limit = max(16 * 1024 * 1024, out_tile_bytes + table_bytes + (2 << 20))

    pe2 = pl.pallas_call(
        functools.partial(_pe_kernel, fold=fold),
        out_shape=jax.ShapeDtypeStruct((L2, D2), jnp.float32),
        grid=(pl.cdiv(L2, TL),),
        in_specs=[
            pl.BlockSpec((1, D2), lambda i: (0, 0)),       # inv_denom, resident
            pl.BlockSpec((1, D2), lambda i: (0, 0)),       # bias, resident
        ],
        out_specs=pl.BlockSpec((TL, D2), lambda i: (i, 0)),
        compiler_params=pltpu.CompilerParams(
            dimension_semantics=("parallel",),
            vmem_limit_bytes=int(vmem_limit),
        ),
    )(inv_denom, bias)

    return pe2.reshape(L, D)


def _reference_pe(d_model: int, max_sequence_length: int) -> jnp.ndarray:
    # pure-JAX reference mirroring the PyTorch code exactly
    even_i = jnp.arange(0, d_model, 2, dtype=jnp.float32)
    denominator = jnp.power(10000.0, even_i / d_model)
    position = jnp.arange(max_sequence_length, dtype=jnp.float32).reshape(
        max_sequence_length, 1
    )
    even_pe = jnp.sin(position / denominator)
    odd_pe = jnp.cos(position / denominator)
    stacked = jnp.stack([even_pe, odd_pe], axis=2)
    return stacked.reshape(max_sequence_length, d_model)


if __name__ == "__main__":
    # small shapes consistent with the module: seq=8, hidden=32
    d_model = 32
    max_sequence_length = 8

    # PRNGKey kept for convention (module is parameter-free / input-free)
    _ = jax.random.PRNGKey(0)

    pe = positional_encoding(d_model, max_sequence_length)
    pe = jax.block_until_ready(pe)

    ref = _reference_pe(d_model, max_sequence_length)
    assert pe.shape == (max_sequence_length, d_model)
    assert pe.dtype == jnp.float32
    assert jnp.allclose(pe, ref, atol=1e-5, rtol=1e-5)

    print("KERNEL_OK")
</pallas_src>

<mosaic_0001>
module attributes {stable_mosaic.version = 11 : i64} {
  func.func @_pe_kernel(%arg0: i32, %arg1: memref<1x128xf32, #tpu.memory_space<vmem>>, %arg2: memref<1x128xf32, #tpu.memory_space<vmem>>, %arg3: memref<2x128xf32, #tpu.memory_space<vmem>>) attributes {dimension_semantics = [#tpu.dimension_semantics<parallel>], iteration_bounds = array<i64: 1>, scalar_prefetch = 0 : i64, scratch_operands = 0 : i64, tpu.core_type = #tpu.core_type<tc>, window_params = [{pipeline_mode = #tpu.pipeline_mode<synchronous>, transform_indices = @transform_0, window_bounds = array<i64: 1, 128>}, {pipeline_mode = #tpu.pipeline_mode<synchronous>, transform_indices = @transform_1, window_bounds = array<i64: 1, 128>}, {transform_indices = @transform_2, window_bounds = array<i64: 2, 128>}]} {
    %c2_i32 = arith.constant 2 : i32
    %0 = arith.muli %arg0, %c2_i32 : i32
    %1 = tpu.iota {dimensions = array<i32: 0>} : vector<2x1xi32>
    %2 = vector.broadcast %0 : i32 to vector<2x1xi32>
    %3 = arith.addi %1, %2 : vector<2x1xi32>
    %c4_i32 = arith.constant 4 : i32
    %4 = vector.broadcast %c4_i32 : i32 to vector<2x1xi32>
    %5 = arith.muli %3, %4 : vector<2x1xi32>
    %6 = arith.sitofp %5 : vector<2x1xi32> to vector<2x1xf32>
    %c0 = arith.constant 0 : index
    %c0_0 = arith.constant 0 : index
    %7 = vector.load %arg1[%c0, %c0_0] : memref<1x128xf32, #tpu.memory_space<vmem>>, vector<1x128xf32>
    %8 = vector.broadcast %6 : vector<2x1xf32> to vector<2x128xf32>
    %9 = vector.broadcast %7 : vector<1x128xf32> to vector<2x128xf32>
    %10 = arith.mulf %8, %9 : vector<2x128xf32>
    %c0_1 = arith.constant 0 : index
    %c0_2 = arith.constant 0 : index
    %11 = vector.load %arg2[%c0_1, %c0_2] : memref<1x128xf32, #tpu.memory_space<vmem>>, vector<1x128xf32>
    %12 = vector.broadcast %11 : vector<1x128xf32> to vector<2x128xf32>
    %13 = arith.addf %10, %12 : vector<2x128xf32>
    %14 = math.sin %13 : vector<2x128xf32>
    %c0_3 = arith.constant 0 : index
    %c0_4 = arith.constant 0 : index
    %15 = vector.load %arg3[%c0_3, %c0_4] : memref<2x128xf32, #tpu.memory_space<vmem>>, vector<2x128xf32>
    tpu.vector_store %arg3[%c0_3, %c0_4], %14 {strides = array<i32>} : memref<2x128xf32, #tpu.memory_space<vmem>>, vector<2x128xf32>,
    return
  }
  func.func @transform_0(%arg0: i32) -> (i32, i32) {
    %c0_i32 = arith.constant 0 : i32
    %c0_i32_0 = arith.constant 0 : i32
    %c0_i32_1 = arith.constant 0 : i32
    return %c0_i32, %c0_i32_0 : i32, i32
  }
  func.func @transform_1(%arg0: i32) -> (i32, i32) {
    %c0_i32 = arith.constant 0 : i32
    %c0_i32_0 = arith.constant 0 : i32
    %c0_i32_1 = arith.constant 0 : i32
    return %c0_i32, %c0_i32_0 : i32, i32
  }
  func.func @transform_2(%arg0: i32) -> (i32, i32) {
    %c0_i32 = arith.constant 0 : i32
    %c0_i32_0 = arith.constant 0 : i32
    return %arg0, %c0_i32 : i32, i32
  }
}

</mosaic_0001>

<llo_original>
// kernel: tpu_custom_call.1
$region0: #{tpu_custom_call.1}
  #allocation0 [shape = 'u32[]', space=smem, size = 0x4, offset = 0x4, fixed_abs, tag = 'smem constant byte address 0x4 - core index']
  #allocation1 [shape = 'u32[144,128]{1,0:T(1,128)}', space=vmem, size = 0x12000, scoped, tag = 'internal scratch']
  %s0 = inlined_call_operand.hbm [shape: f32[1,128], index: 0, kind: input, shape index: {}]
  %s1 = inlined_call_operand.vmem [shape: f32[1,128], index: 1, kind: input, shape index: {}]
  %s2 = inlined_call_operand.hbm [shape: f32[2,128], index: 2, kind: output, shape index: {}]
  %s3 = sld [smem:[#allocation0]]
  $region22: #{tpu_custom_call.1} parent=0
    _
  %s5 = ssub.s32 1, %s3
  %s6 = scalar_select 0, %s5, %s3
  $region1: #{tpu_custom_call.1} parent=0
    #allocation2 [shape = 'u8[512]{0}', space=vmem, size = 0x400, scoped, tag = 'input window, operand 0, single buffered']
    #allocation3 [shape = 's32[1]{0}', space=sflag, size = 0x4, scoped, tag = 'scoped memory for tpu_custom_call.1']
    #allocation4 [shape = 's32[1]{0}', space=sflag, size = 0x4, scoped, tag = 'scoped memory for tpu_custom_call.1']
    #allocation5 [shape = 'u8[1024]{0}', space=vmem, size = 0x400, scoped, tag = 'output window, operand 0, single buffered']
    %7 = vsyncpa [#allocation3], 0
    %8 = vsyncpa [#allocation4], 0
    // Predicated region
    $region2: #{tpu_custom_call.1} parent=1 // pred_check
      _
    $region3: #{tpu_custom_call.1} parent=1 // pred_check_branch
      %10 = sbr.rel (0) target = $region5
    $region4: #{tpu_custom_call.1} parent=1 // pred_region
      %s12 = ssub.s32 16, 16
      %13 = vsyncadd [#allocation3], %s12
      %s15 = sshll.u32 [#allocation2], 4
      %s16 = int_to_ptr.vmem [resolvable:$true] %s15
      %18 = dma.hbm_to_vmem [thread:$0]  %s0, 16, %s16, [#allocation3]
    $region5: #{tpu_custom_call.1} parent=1 // pred_fallthru
      _
    // Predicated region
    $region6: #{tpu_custom_call.1} parent=1 // pred_check
      _
    $region7: #{tpu_custom_call.1} parent=1 // pred_check_branch
      %20 = sbr.rel (0) target = $region9
    $region8: #{tpu_custom_call.1} parent=1 // pred_region
      _
    $region9: #{tpu_custom_call.1} parent=1 // pred_fallthru
      _
    // Predicated region
    $region10: #{tpu_custom_call.1} parent=1 // pred_check
      _
    $region11: #{tpu_custom_call.1} parent=1 // pred_check_branch
      %22 = sbr.rel (0) target = $region13
    $region12: #{tpu_custom_call.1} parent=1 // pred_region
      %23 = dma.done [#allocation3], 16
    $region13: #{tpu_custom_call.1} parent=1 // pred_fallthru
      _
    %s24 = smul.u32 0, 2
    %v25 = vlaneseq
    %v26 = vshrl.u32 %v25, 7
    %v27 = vstv %s24
    %v28 = vadd.s32 %v26, %v27
    %v29 = vmul.u32 %v28, 4
    %v30 = vcvt.s32.f32 %v29
    %v31 = vld [vmem:[#allocation2] sm:$0x1]
    %v33 = vlaneseq
    %v34 = vshrl.u32 %v33, 7
    %v35 = vsub.s32 0, %v34
    %v36 = vrot.slane %v31, %v35
    %v38 = vmul.f32 %v30, %v36
    %v39 = vld [vmem:[%s1] sm:$0x1]
    %v41 = vlaneseq
    %v42 = vshrl.u32 %v41, 7
    %v43 = vsub.s32 0, %v42
    %v44 = vrot.slane %v39, %v43
    %v46 = vadd.f32 %v38, %v44
    %v47 = vand.u32 2147483647, %v46
    %vm48 = vcmp.le.f32.partialorder %v47, 0.7853982
    %vm49 = vcmp.lt.s32.totalorder %v46, 0
    %v50 = vand.u32 %v46, 2139095040
    %v51 = vshrl.u32 %v50, 23
    %v52 = vsub.s32 %v51, 127
    %v53 = vand.u32 2147483647, %v46
    %v54 = vand.u32 %v53, 8388607
    %v55 = vor.u32 %v54, 8388608
    %v56 = vsub.s32 0, %v55
    %v57 = vadd.s32 %v52, 1
    %vm58 = vcmp.gt.s32.totalorder %v57, 0
    %v59 = vsel %vm58, %v57, 0
    %v60 = vshrl.u32 %v59, 5
    %v61 = vand.u32 %v59, 31
    %v62 = vsub.s32 32, %v61
    %v63 = vshrl.u32 683565275, %v62
    %v64 = vshll.u32 683565275, %v61
    %v65 = vshrl.u32 2475754826, %v62
    %v66 = vor.u32 %v64, %v65
    %v67 = vshll.u32 2475754826, %v61
    %v68 = vshrl.u32 2131351028, %v62
    %v69 = vor.u32 %v67, %v68
    %v70 = vshll.u32 2131351028, %v61
    %v71 = vshrl.u32 2102212464, %v62
    %v72 = vor.u32 %v70, %v71
    %v73 = vshll.u32 2102212464, %v61
    %v74 = vshrl.u32 920167782, %v62
    %v75 = vor.u32 %v73, %v74
    %v76 = vshll.u32 920167782, %v61
    %v77 = vshrl.u32 1326507024, %v62
    %v78 = vor.u32 %v76, %v77
    %vm79 = vcmp.lt.s32.totalorder %v60, 1
    %vm80 = vcmp.lt.s32.totalorder %v60, 2
    %vm81 = vcmp.lt.s32.totalorder %v60, 3
    %vm82 = vcmp.lt.s32.totalorder %v60, 4
    %v83 = vsel %vm79, %v63, %v66
    %v84 = vsel %vm82, %v72, 2102212464
    %v85 = vsel %vm81, %v69, %v84
    %v86 = vsel %vm80, %v83, %v85
    %v87 = vsel %vm79, %v66, %v69
    %v88 = vsel %vm82, %v75, 920167782
    %v89 = vsel %vm81, %v72, %v88
    %v90 = vsel %vm80, %v87, %v89
    %v91 = vsel %vm79, %v69, %v72
    %v92 = vsel %vm82, %v78, 1326507024
    %v93 = vsel %vm81, %v75, %v92
    %v94 = vsel %vm80, %v91, %v93
    %v95 = vshll.u32 %v55, 8
    %v96 = vmul.u32.u64.compose %v95, %v94
    %v97 = vextract.low.u32 %v96
    %v98 = vextract.high.u32 %v96
    %v99 = vmul.u32.u64.compose %v95, %v90
    %v100 = vextract.low.u32 %v99
    %v101 = vextract.high.u32 %v99
    %v102 = vmul.u32 %v95, %v86
    %v103 = vadd.s32 %v98, %v100
    %vm104 = vc.u32 %v98, %v100
    %v105 = vadd.s32 %v101, 1
    %v106 = vsel %vm104, %v105, %v101
    %v107 = vadd.s32 %v102, %v106
    %v108 = vadd.s32 %v107, 536870912
    %v109 = vshrl.u32 %v108, 30
    %v110 = vshll.u32 %v109, 30
    %v111 = vsub.s32 %v107, %v110
    %vm112 = vcmp.lt.s32.totalorder %v111, 0
    %v113 = vsub.s32 0, %v111
    %v114 = vsel %vm112, %v113, %v111
    %v115 = vclz %v114
    %v116 = vsub.s32 %v115, 2
    %vm117 = vcmp.gt.s32.totalorder 0, %v116
    %v118 = vsel %vm117, 0, %v116
    %v119 = vsub.s32 32, %v118
    %v120 = vshll.u32 %v111, %v118
    %v121 = vshrl.u32 %v103, %v119
    %v122 = vor.u32 %v120, %v121
    %v123 = vsub.s32 4294967266, %v118
    %v124 = vadd.s32 %v123, 127
    %v125 = vshll.u32 %v124, 23
    %v126 = vor.u32 4788187, %v125
    %v127 = vand.u32 2147483647, %v126
    %v129 = vcvt.s32.f32 %v122
    %v130 = vmul.f32 %v129, %v127
    %v131 = vxor.u32 %v130, 2147483648
    %v132 = vsel %vm49, %v131, %v130
    %v133 = vsub.s32 4, %v109
    %v134 = vsel %vm49, %v133, %v109
    %v135 = vsel %vm48, %v46, %v132
    %v136 = vsel %vm48, 0, %v134
    %v137 = vcosq.f32.pop %v135
    %v138 = vsinq.f32.pop %v135
    %vm139 = vweird.f32 %v46
    %v140 = vadd.s32 %v136, 3
    %v141 = vand.u32 %v140, 3
    %vm142 = vcmp.lt.s32.totalorder %v141, 2
    %vm143 = vcmp.eq.s32.totalorder %v141, 0
    %v144 = vxor.u32 %v138, 2147483648
    %v145 = vsel %vm143, %v137, %v144
    %vm146 = vcmp.eq.s32.totalorder %v141, 2
    %v147 = vxor.u32 %v137, 2147483648
    %v148 = vsel %vm146, %v147, %v138
    %v149 = vsel %vm142, %v145, %v148
    %v150 = vsel %vm139, nan, %v149
    %151 = vst [vmem:[#allocation5] sm:$0x3] %v150
    // Predicated region
    $region14: #{tpu_custom_call.1} parent=1 // pred_check
      _
    $region15: #{tpu_custom_call.1} parent=1 // pred_check_branch
      %153 = sbr.rel (0) target = $region17
    $region16: #{tpu_custom_call.1} parent=1 // pred_region
      %s155 = ssub.s32 32, 32
      %156 = vsyncadd [#allocation4], %s155
      %s158 = sshll.u32 [#allocation5], 4
      %s159 = int_to_ptr.vmem [resolvable:$true] %s158
      %161 = dma.vmem_to_hbm [thread:$0]  %s159, 32, %s2, [#allocation4]
    $region17: #{tpu_custom_call.1} parent=1 // pred_fallthru
      _
    // Predicated region
    $region18: #{tpu_custom_call.1} parent=1 // pred_check
      _
    $region19: #{tpu_custom_call.1} parent=1 // pred_check_branch
      %163 = sbr.rel (0) target = $region21
    $region20: #{tpu_custom_call.1} parent=1 // pred_region
      %164 = dma.done [#allocation4], 32
    $region21: #{tpu_custom_call.1} parent=1 // pred_fallthru
      _
    %165 = vsyncpa [#allocation3], 1
    %166 = vsyncpa [#allocation4], 1

</llo_original>
